<compile_context>
chip_gen: v5e
topology: v5e:2x2
jax: 0.10.0
libtpu: 0.0.40
codegen_flags: <defaults>
</compile_context>

<pallas_src>
import functools
import math

import jax
import jax.numpy as jnp
from jax.experimental import pallas as pl
from jax.experimental.pallas import tpu as pltpu

_EPS = 1e-5


def _round_up(x, m):
    return (x + m - 1) // m * m


def _hw_defaults():
    # Generation-aware scoped-VMEM limit and spatial-tile cap.
    #   v5e / v6e: 128 MiB physical VMEM -> large scoped limit, 2048-lane tiles are plenty.
    #   v7x      :  64 MiB physical VMEM, but 3.2 TB/s HBM makes the ~0.35 us per-grid-step
    #              overhead significant -> allow up to 4096-lane tiles within a 48 MiB limit.
    try:
        vmem_phys = int(pltpu.get_tpu_info().vmem_capacity_bytes)
    except Exception:  # no device / query unavailable -> conservative (v7x-sized) defaults
        vmem_phys = 64 * 1024 * 1024
    if vmem_phys >= (100 << 20):
        return 96 * 1024 * 1024, 2048
    return 48 * 1024 * 1024, 4096


def _conv_stats_kernel(x1_ref, x2_ref, w1_ref, w2_ref, stats_ref, *, c_half_pad):
    # x*_ref   : (1, C_in_pad, TS)  channel-major activation tiles (spatial on lanes)
    # w*_ref   : (C_half_pad, C_in_pad) resident weights
    # stats_ref: (1, 1, 2, C_out_pad)  per-tile [sum ; sum-of-squares], channels on lanes
    x1 = jnp.maximum(x1_ref[0], 0.0)  # ReLU is pointwise -> commutes with the stride-4 subsample
    x2 = jnp.maximum(x2_ref[0], 0.0)

    # 1x1 stride-4 convs == channel matmuls on the MXU, f32 accumulation.
    y1 = jnp.dot(w1_ref[...], x1, preferred_element_type=jnp.float32)  # (C_half_pad, TS)
    y2 = jnp.dot(w2_ref[...], x2, preferred_element_type=jnp.float32)  # (C_half_pad, TS)

    # Lane-dense partial-moment stores (channels on lanes): 2 wide stores per tile.
    # Zero-padded spatial tail / zero-padded channels contribute exactly 0 to the sums.
    stats_ref[0, 0, :, :c_half_pad] = jnp.stack(
        [jnp.sum(y1, axis=1), jnp.sum(y1 * y1, axis=1)], axis=0)
    stats_ref[0, 0, :, c_half_pad:] = jnp.stack(
        [jnp.sum(y2, axis=1), jnp.sum(y2 * y2, axis=1)], axis=0)


def _conv_bn_kernel(x1_ref, x2_ref, w1_ref, w2_ref, ss_ref, o_ref, *, c_half_pad):
    # Phase 2: re-read x1/x2, recompute the cheap 1x1 convs, and normalize in place so the
    # un-normalized activation never touches HBM.  ss_ref: (2, C_out_pad, 1) = [scale; shift].
    x1 = jnp.maximum(x1_ref[0], 0.0)
    x2 = jnp.maximum(x2_ref[0], 0.0)
    y1 = jnp.dot(w1_ref[...], x1, preferred_element_type=jnp.float32)  # (C_half_pad, TS)
    y2 = jnp.dot(w2_ref[...], x2, preferred_element_type=jnp.float32)

    scale = ss_ref[0]  # (C_out_pad, 1), broadcasts over the lane (spatial) axis
    shift = ss_ref[1]

    # channel concat == writing the two halves into their (sublane-aligned) output slices
    o_ref[0, :c_half_pad, :] = y1 * scale[:c_half_pad] + shift[:c_half_pad]
    o_ref[0, c_half_pad:, :] = y2 * scale[c_half_pad:] + shift[c_half_pad:]


def double_factorized_reduce(x_nchw, w1, w2, *, eps=_EPS, use_bf16_matmul=True,
                             max_tile_s=None):
    """Forward of DoubleFactorizedReduce.

    x_nchw: (N, C_in, H, W) float32; w1, w2: (C_out//2, C_in) 1x1-conv weights.
    Returns (N, C_out, ceil(H/4), ceil(W/4)) float32 (NCHW).
    use_bf16_matmul=True is the fast path (bf16 MXU inputs, f32 accumulation).
    """
    N, C_in, H, W = x_nchw.shape
    C_half = w1.shape[0]
    C_out = 2 * C_half

    # Stride-4 subsamples for the two branches (see TODO at top for fusing this into the DMA).
    x1 = x_nchw[:, :, 0::4, 0::4]
    x2 = x_nchw[:, :, 1::4, 1::4]
    Ho, Wo = x1.shape[2], x1.shape[3]
    assert (Ho, Wo) == (x2.shape[2], x2.shape[3]), \
        "torch.cat requires matching spatial shapes from the two conv branches"
    S = Ho * Wo

    # Channel-major flattening (merge trailing dims only -> no transpose copy).
    x1f = x1.reshape(N, C_in, S)
    x2f = x2.reshape(N, C_in, S)

    # ---- dtypes & channel padding (sublane alignment: 8 rows f32 / 16 rows bf16) ----
    in_dtype = jnp.bfloat16 if use_bf16_matmul else jnp.float32
    c_in_mult = 16 if use_bf16_matmul else 8
    C_in_pad = _round_up(C_in, c_in_mult)
    C_half_pad = _round_up(C_half, 8)      # conv/BN output stays f32 -> 8-row sublane tiles
    C_out_pad = 2 * C_half_pad

    # ---- spatial (lane) tiling: generation-aware cap + VMEM-budget check ----
    vmem_limit, gen_cap = _hw_defaults()
    if max_tile_s is not None:
        assert max_tile_s % 128 == 0
        gen_cap = max_tile_s
    # Per grid step, double-buffered (phase 2 is the heavier phase: reads x1+x2, writes out).
    per_lane_bytes = 2 * (2 * C_in_pad * (2 if use_bf16_matmul else 4)) + 2 * (C_out_pad * 4)
    ts_budget = max(128, (int(0.6 * vmem_limit) // per_lane_bytes) // 128 * 128)
    cap = min(gen_cap, ts_budget)

    TS = S if S <= cap else cap
    # Megacore (v7x): with N == 1 and a single spatial tile the 2-TC grid leaves one core
    # idle; split the spatial axis when it is big enough for two >=128-lane tiles.
    if N == 1 and TS == S and S > 256:
        TS = _round_up(pl.cdiv(S, 2), 128)
    S_pad = pl.cdiv(S, TS) * TS
    n_s = S_pad // TS

    # ---- cast + pad activations (single pad pass; zeros are exact for ReLU/matmul/stats) ----
    x1f = x1f.astype(in_dtype)
    x2f = x2f.astype(in_dtype)
    if C_in_pad != C_in or S_pad != S:
        pad = ((0, 0), (0, C_in_pad - C_in), (0, S_pad - S))
        x1f = jnp.pad(x1f, pad)
        x2f = jnp.pad(x2f, pad)

    w1c = jnp.zeros((C_half_pad, C_in_pad), in_dtype).at[:C_half, :C_in].set(w1.astype(in_dtype))
    w2c = jnp.zeros((C_half_pad, C_in_pad), in_dtype).at[:C_half, :C_in].set(w2.astype(in_dtype))

    grid = (N, n_s)
    cparams = pltpu.CompilerParams(
        dimension_semantics=("parallel", "parallel"),  # per-tile partial stats -> fully parallel
        vmem_limit_bytes=vmem_limit,
    )
    x_spec = pl.BlockSpec((1, C_in_pad, TS), lambda n, s: (n, 0, s))
    w_spec = pl.BlockSpec((C_half_pad, C_in_pad), lambda n, s: (0, 0))  # resident weights

    # --- phase 1: relu + both 1x1 stride-4 convs + per-tile BN moment partials (stats only) ---
    stats = pl.pallas_call(
        functools.partial(_conv_stats_kernel, c_half_pad=C_half_pad),
        out_shape=jax.ShapeDtypeStruct((N, n_s, 2, C_out_pad), jnp.float32),
        grid=grid,
        in_specs=[x_spec, x_spec, w_spec, w_spec],
        out_specs=pl.BlockSpec((1, 1, 2, C_out_pad), lambda n, s: (n, s, 0, 0)),
        compiler_params=cparams,
    )(x1f, x2f, w1c, w2c)

    # --- tiny global reduction of the per-tile moments -> folded BN scale/shift ---
    # E[y^2] - E[y]^2 in f32; clamp guards tiny negative variance from cancellation.
    # TODO(synk): switch to per-tile shifted moments (Chan merge) if tolerances tighten.
    count = jnp.float32(N * S)                  # true element count (padding contributes 0)
    total = jnp.sum(stats, axis=(0, 1))         # (2, C_out_pad)
    mean = total[0] / count
    var = jnp.maximum(total[1] / count - mean * mean, 0.0)
    inv_std = jax.lax.rsqrt(var + eps)
    scale_shift = jnp.stack([inv_std, -mean * inv_std], axis=0).reshape(2, C_out_pad, 1)

    # --- phase 2: recompute convs + apply scale/shift (gamma=1, beta=0 folded away) ---
    out_buf = pl.pallas_call(
        functools.partial(_conv_bn_kernel, c_half_pad=C_half_pad),
        out_shape=jax.ShapeDtypeStruct((N, C_out_pad, S_pad), jnp.float32),
        grid=grid,
        in_specs=[x_spec, x_spec, w_spec, w_spec,
                  pl.BlockSpec((2, C_out_pad, 1), lambda n, s: (0, 0, 0))],
        out_specs=pl.BlockSpec((1, C_out_pad, TS), lambda n, s: (n, 0, s)),
        compiler_params=cparams,
    )(x1f, x2f, w1c, w2c, scale_shift)

    # Already channel-major NCHW: crop spatial pad, gather real channels, unflatten.
    out_flat = out_buf[:, :, :S]
    if C_half_pad == C_half:
        out_c = out_flat                      # no channel padding -> already contiguous
    else:
        out_c = jnp.concatenate(
            [out_flat[:, :C_half], out_flat[:, C_half_pad:C_half_pad + C_half]], axis=1)
    return out_c.reshape(N, C_out, Ho, Wo)


def init_params(key, C_in, C_out):
    # Kaiming-normal (fan_in mode, gain sqrt(2)), as in the module's _initialize_weights.
    # 1x1 conv weights stored as (C_out//2, C_in) so the kernel matmul is w @ x directly.
    assert C_out % 2 == 0
    C_half = C_out // 2
    k1, k2 = jax.random.split(key)
    std = math.sqrt(2.0 / C_in)
    w1 = jax.random.normal(k1, (C_half, C_in), dtype=jnp.float32) * std
    w2 = jax.random.normal(k2, (C_half, C_in), dtype=jnp.float32) * std
    # BatchNorm affine params initialize to gamma=1, beta=0 -> pure normalization, folded away.
    return w1, w2


def _reference_forward(x, w1, w2, eps=_EPS):
    # Pure-JAX f32 reference of the PyTorch module's forward (correctness check only).
    y = jnp.maximum(x, 0.0)
    o1 = jnp.einsum("nchw,oc->nohw", y[:, :, 0::4, 0::4], w1)
    o2 = jnp.einsum("nchw,oc->nohw", y[:, :, 1::4, 1::4], w2)
    o = jnp.concatenate([o1, o2], axis=1)
    mean = jnp.mean(o, axis=(0, 2, 3), keepdims=True)
    var = jnp.mean((o - mean) ** 2, axis=(0, 2, 3), keepdims=True)
    return (o - mean) * jax.lax.rsqrt(var + eps)


if __name__ == "__main__":
    key = jax.random.PRNGKey(0)
    kx, kw = jax.random.split(key)

    N, C_in, H, W = 2, 4, 16, 16
    C_out = 8

    x = jax.random.normal(kx, (N, C_in, H, W), dtype=jnp.float32)
    w1, w2 = init_params(kw, C_in, C_out)
    ref = _reference_forward(x, w1, w2)

    # Exact-numerics path (f32 MXU inputs).
    out_f32 = double_factorized_reduce(x, w1, w2, use_bf16_matmul=False)
    jax.block_until_ready(out_f32)
    assert out_f32.shape == (N, C_out, H // 4, W // 4), out_f32.shape
    assert bool(jnp.isfinite(out_f32).all())
    err_f32 = float(jnp.max(jnp.abs(out_f32 - ref)))
    assert err_f32 < 1e-3, f"f32 path max abs error vs reference: {err_f32}"

    # Default fast path (bf16 MXU inputs, f32 accumulation) -> bf16 rounding tolerance.
    out_bf16 = double_factorized_reduce(x, w1, w2)
    jax.block_until_ready(out_bf16)
    assert out_bf16.shape == (N, C_out, H // 4, W // 4), out_bf16.shape
    assert bool(jnp.isfinite(out_bf16).all())
    err_bf16 = float(jnp.max(jnp.abs(out_bf16 - ref)))
    assert err_bf16 < 1e-1, f"bf16 path max abs error vs reference: {err_bf16}"

    print("KERNEL_OK")
</pallas_src>

<mosaic_0001>
module attributes {stable_mosaic.version = 11 : i64} {
  func.func @_conv_stats_kernel(%arg0: i32, %arg1: i32, %arg2: memref<1x8x16xf32, #tpu.memory_space<vmem>>, %arg3: memref<1x8x16xf32, #tpu.memory_space<vmem>>, %arg4: memref<8x8xf32, #tpu.memory_space<vmem>>, %arg5: memref<8x8xf32, #tpu.memory_space<vmem>>, %arg6: memref<1x1x2x16xf32, #tpu.memory_space<vmem>>) attributes {dimension_semantics = [#tpu.dimension_semantics<parallel>, #tpu.dimension_semantics<parallel>], iteration_bounds = array<i64: 2, 1>, scalar_prefetch = 0 : i64, scratch_operands = 0 : i64, tpu.core_type = #tpu.core_type<tc>, window_params = [{transform_indices = @transform_0, window_bounds = array<i64: 1, 8, 16>}, {transform_indices = @transform_1, window_bounds = array<i64: 1, 8, 16>}, {pipeline_mode = #tpu.pipeline_mode<synchronous>, transform_indices = @transform_2, window_bounds = array<i64: 8, 8>}, {pipeline_mode = #tpu.pipeline_mode<synchronous>, transform_indices = @transform_3, window_bounds = array<i64: 8, 8>}, {transform_indices = @transform_4, window_bounds = array<i64: 1, 1, 2, 16>}]} {
    %c0 = arith.constant 0 : index
    %c0_0 = arith.constant 0 : index
    %c0_1 = arith.constant 0 : index
    %0 = vector.load %arg2[%c0, %c0_0, %c0_1] : memref<1x8x16xf32, #tpu.memory_space<vmem>>, vector<1x8x16xf32>
    %1 = vector.shape_cast %0 : vector<1x8x16xf32> to vector<8x16xf32>
    %cst = arith.constant 0.000000e+00 : f32
    %2 = vector.broadcast %cst : f32 to vector<8x16xf32>
    %3 = arith.maximumf %1, %2 : vector<8x16xf32>
    %c0_2 = arith.constant 0 : index
    %c0_3 = arith.constant 0 : index
    %c0_4 = arith.constant 0 : index
    %4 = vector.load %arg3[%c0_2, %c0_3, %c0_4] : memref<1x8x16xf32, #tpu.memory_space<vmem>>, vector<1x8x16xf32>
    %5 = vector.shape_cast %4 : vector<1x8x16xf32> to vector<8x16xf32>
    %cst_5 = arith.constant 0.000000e+00 : f32
    %6 = vector.broadcast %cst_5 : f32 to vector<8x16xf32>
    %7 = arith.maximumf %5, %6 : vector<8x16xf32>
    %c0_6 = arith.constant 0 : index
    %c0_7 = arith.constant 0 : index
    %8 = vector.load %arg4[%c0_6, %c0_7] : memref<8x8xf32, #tpu.memory_space<vmem>>, vector<8x8xf32>
    %cst_8 = arith.constant dense<0.000000e+00> : vector<8x16xf32>
    %9 = tpu.matmul %8, %3, %cst_8 {dimension_numbers = #tpu.dot_dimension_numbers<[1], [0], [0], [1], [0, 0, 1, 1], [], []>} : vector<8x8xf32>, vector<8x16xf32>, vector<8x16xf32> -> vector<8x16xf32>
    %c0_9 = arith.constant 0 : index
    %c0_10 = arith.constant 0 : index
    %10 = vector.load %arg5[%c0_9, %c0_10] : memref<8x8xf32, #tpu.memory_space<vmem>>, vector<8x8xf32>
    %cst_11 = arith.constant dense<0.000000e+00> : vector<8x16xf32>
    %11 = tpu.matmul %10, %7, %cst_11 {dimension_numbers = #tpu.dot_dimension_numbers<[1], [0], [0], [1], [0, 0, 1, 1], [], []>} : vector<8x8xf32>, vector<8x16xf32>, vector<8x16xf32> -> vector<8x16xf32>
    %cst_12 = arith.constant dense<0.000000e+00> : vector<8xf32>
    %12 = vector.multi_reduction <add>, %9, %cst_12 [1] : vector<8x16xf32> to vector<8xf32>
    %13 = arith.mulf %9, %9 : vector<8x16xf32>
    %cst_13 = arith.constant dense<0.000000e+00> : vector<8xf32>
    %14 = vector.multi_reduction <add>, %13, %cst_13 [1] : vector<8x16xf32> to vector<8xf32>
    %15 = vector.shape_cast %12 : vector<8xf32> to vector<1x8xf32>
    %16 = vector.shape_cast %14 : vector<8xf32> to vector<1x8xf32>
    %17 = tpu.concatenate %15, %16 in 0 : vector<1x8xf32>, vector<1x8xf32> -> vector<2x8xf32>
    %c0_14 = arith.constant 0 : index
    %c0_15 = arith.constant 0 : index
    %c0_16 = arith.constant 0 : index
    %c0_17 = arith.constant 0 : index
    %18 = vector.load %arg6[%c0_14, %c0_15, %c0_16, %c0_17] : memref<1x1x2x16xf32, #tpu.memory_space<vmem>>, vector<1x1x2x8xf32>
    %19 = vector.shape_cast %18 : vector<1x1x2x8xf32> to vector<2x8xf32>
    %20 = vector.shape_cast %17 : vector<2x8xf32> to vector<1x1x2x8xf32>
    tpu.vector_store %arg6[%c0_14, %c0_15, %c0_16, %c0_17], %20 {strides = array<i32>} : memref<1x1x2x16xf32, #tpu.memory_space<vmem>>, vector<1x1x2x8xf32>,
    %cst_18 = arith.constant dense<0.000000e+00> : vector<8xf32>
    %21 = vector.multi_reduction <add>, %11, %cst_18 [1] : vector<8x16xf32> to vector<8xf32>
    %22 = arith.mulf %11, %11 : vector<8x16xf32>
    %cst_19 = arith.constant dense<0.000000e+00> : vector<8xf32>
    %23 = vector.multi_reduction <add>, %22, %cst_19 [1] : vector<8x16xf32> to vector<8xf32>
    %24 = vector.shape_cast %21 : vector<8xf32> to vector<1x8xf32>
    %25 = vector.shape_cast %23 : vector<8xf32> to vector<1x8xf32>
    %26 = tpu.concatenate %24, %25 in 0 : vector<1x8xf32>, vector<1x8xf32> -> vector<2x8xf32>
    %c0_20 = arith.constant 0 : index
    %c0_21 = arith.constant 0 : index
    %c0_22 = arith.constant 0 : index
    %c8 = arith.constant 8 : index
    %27 = vector.load %arg6[%c0_20, %c0_21, %c0_22, %c8] : memref<1x1x2x16xf32, #tpu.memory_space<vmem>>, vector<1x1x2x8xf32>
    %28 = vector.shape_cast %27 : vector<1x1x2x8xf32> to vector<2x8xf32>
    %29 = vector.shape_cast %26 : vector<2x8xf32> to vector<1x1x2x8xf32>
    tpu.vector_store %arg6[%c0_20, %c0_21, %c0_22, %c8], %29 {strides = array<i32>} : memref<1x1x2x16xf32, #tpu.memory_space<vmem>>, vector<1x1x2x8xf32>,
    return
  }
  func.func @transform_0(%arg0: i32, %arg1: i32) -> (i32, i32, i32) {
    %c0_i32 = arith.constant 0 : i32
    %c0_i32_0 = arith.constant 0 : i32
    return %arg0, %c0_i32, %arg1 : i32, i32, i32
  }
  func.func @transform_1(%arg0: i32, %arg1: i32) -> (i32, i32, i32) {
    %c0_i32 = arith.constant 0 : i32
    %c0_i32_0 = arith.constant 0 : i32
    return %arg0, %c0_i32, %arg1 : i32, i32, i32
  }
  func.func @transform_2(%arg0: i32, %arg1: i32) -> (i32, i32) {
    %c0_i32 = arith.constant 0 : i32
    %c0_i32_0 = arith.constant 0 : i32
    %c0_i32_1 = arith.constant 0 : i32
    return %c0_i32, %c0_i32_0 : i32, i32
  }
  func.func @transform_3(%arg0: i32, %arg1: i32) -> (i32, i32) {
    %c0_i32 = arith.constant 0 : i32
    %c0_i32_0 = arith.constant 0 : i32
    %c0_i32_1 = arith.constant 0 : i32
    return %c0_i32, %c0_i32_0 : i32, i32
  }
  func.func @transform_4(%arg0: i32, %arg1: i32) -> (i32, i32, i32, i32) {
    %c0_i32 = arith.constant 0 : i32
    %c0_i32_0 = arith.constant 0 : i32
    %c0_i32_1 = arith.constant 0 : i32
    return %arg0, %arg1, %c0_i32, %c0_i32_0 : i32, i32, i32, i32
  }
}

</mosaic_0001>

<llo_original>
// kernel: tpu_custom_call.1
$region0: #{tpu_custom_call.1}
  #allocation0 [shape = 'u32[]', space=smem, size = 0x4, offset = 0x4, fixed_abs, tag = 'smem constant byte address 0x4 - core index']
  #allocation1 [shape = 'u32[72,128]{1,0:T(1,128)}', space=vmem, size = 0x9000, scoped, tag = 'internal scratch']
  %s0 = inlined_call_operand.hbm [shape: f32[2,8,16], index: 0, kind: input, shape index: {}]
  %s1 = inlined_call_operand.hbm [shape: f32[2,8,16], index: 1, kind: input, shape index: {}]
  %s2 = inlined_call_operand.hbm [shape: f32[8,8], index: 2, kind: input, shape index: {}]
  %s3 = inlined_call_operand.hbm [shape: f32[8,8], index: 3, kind: input, shape index: {}]
  %s4 = inlined_call_operand.hbm [shape: f32[2,1,2,16], index: 4, kind: output, shape index: {}]
  %s5 = sld [smem:[#allocation0]]
  $region65: #{tpu_custom_call.1} parent=0
    _
  %s7 = ssub.s32 1, %s5
  %s8 = scalar_select 0, %s7, %s5
  $region1: #{tpu_custom_call.1} parent=0
    #allocation2 [shape = 'u8[8192]{0}', space=vmem, size = 0x2000, scoped, tag = 'input window, operand 0']
    #allocation3 [shape = 's32[2]{0}', space=sflag, size = 0x8, scoped, tag = 'scoped memory for tpu_custom_call.1']
    #allocation4 [shape = 's32[2]{0}', space=sflag, size = 0x8, scoped, tag = 'scoped memory for tpu_custom_call.1']
    #allocation5 [shape = 'u8[8192]{0}', space=vmem, size = 0x2000, scoped, tag = 'input window, operand 1']
    #allocation6 [shape = 's32[2]{0}', space=sflag, size = 0x8, scoped, tag = 'scoped memory for tpu_custom_call.1']
    #allocation7 [shape = 'u8[4096]{0}', space=vmem, size = 0x1000, scoped, tag = 'input window, operand 2, single buffered']
    #allocation8 [shape = 'u8[4096]{0}', space=vmem, size = 0x1000, scoped, tag = 'input window, operand 3, single buffered']
    #allocation9 [shape = 's32[1]{0}', space=sflag, size = 0x4, scoped, tag = 'scoped memory for tpu_custom_call.1']
    #allocation10 [shape = 'u8[2048]{0}', space=vmem, size = 0x800, scoped, tag = 'output window, operand 0']
    %9 = vsyncpa [#allocation3], 0
    %s10 = scalar_lea.sflag [#allocation3], 1
    %11 = vsyncpa %s10, 0
    %12 = vsyncpa [#allocation6], 0
    %s13 = scalar_lea.sflag [#allocation6], 1
    %14 = vsyncpa %s13, 0
    %15 = vsyncpa [#allocation9], 0
    %16 = vsyncpa [#allocation4], 0
    %s17 = scalar_lea.sflag [#allocation4], 1
    %18 = vsyncpa %s17, 0
    loop: start=0, step=1, limit=4
    $region2: #{tpu_custom_call.1} parent=1 // loop_pre_header
      _
    $region3: #{tpu_custom_call.1} parent=1 // loop_header
      %s20 = sphi 0, %s24
      %p21 = scmp.ge.s32.totalorder %s20, 4
      %s27 = sphi 0, %s39
      %s28 = sphi 0, %s35
      %s29 = sphi 0, %s27
      %s30 = sphi 0, %s28
      %s31 = sphi 0, %s29
      %s32 = sphi 0, %s30
      %s44 = sphi 0, %s46
      %s47 = sphi 0, %s44
      %s48 = sphi 0, %s47
      %s64 = sphi 0, %s48
      %s72 = sphi 0, %s74
      %s75 = sphi 0, %s72
      %s76 = sphi 0, %s75
      %s92 = sphi 0, %s76
      %s96 = sphi 0, %s96
      %s98 = sphi 0, %s96
      %s99 = sphi 0, %s98
      %s113 = sphi 0, %s99
      %s117 = sphi 0, %s117
      %s119 = sphi 0, %s117
      %s120 = sphi 0, %s119
      %s134 = sphi 0, %s120
      %s142 = sphi 0, %s144
      %s145 = sphi 0, %s142
      %s146 = sphi 0, %s145
      %s162 = sphi 0, %s146
    $region4: #{tpu_custom_call.1} parent=1 // loop_header_branch
      %23 = sbr.rel (%p21) target = $region8
    $region5: #{tpu_custom_call.1} parent=1 // loop_body
      %s25 = ssub.s32 %s20, 1
      %s26 = ssub.s32 %s20, 2
      %s33 = sadd.s32 1, %s28
      %p34 = scmp.ge.s32.totalorder %s33, 1
      %s35 = scalar_select %p34, 0, %s33
      %s36 = sadd.s32 1, %s27
      %s37 = scalar_select %p34, %s36, %s27
      %p38 = scmp.ge.s32.totalorder %s37, 2
      %s39 = scalar_select %p38, 0, %s37
      %s40 = ssub.s32 %s27, %s39
      %s41 = ssub.s32 %s28, %s35
      %s42 = sor.u32 %s40, %s41
      %p43 = scmp.eq.s32.totalorder %s42, 0
      %s45 = sadd.s32 %s44, 1
      %s46 = scalar_select %p43, %s44, %s45
      %p49 = pneg %p43
      %p50 = scmp.eq.s32.totalorder %s20, 1
      %p51 = por %p49, %p50
      %p52 = scmp.ne.s32.totalorder %s44, %s47
      %p53 = scmp.eq.s32.totalorder %s20, 0
      %p54 = por %p52, %p53
      %p55 = scmp.ne.s32.totalorder %s44, %s47
      %p56 = scmp.eq.s32.totalorder %s25, 1
      %p57 = por %p55, %p56
      %p58 = scmp.ne.s32.totalorder %s47, %s48
      %p59 = scmp.eq.s32.totalorder %s25, 0
      %p60 = por %p58, %p59
      %p61 = scmp.ne.s32.totalorder %s47, %s48
      %p62 = scmp.eq.s32.totalorder %s26, 1
      %p63 = por %p61, %p62
      %p65 = scmp.ne.s32.totalorder %s48, %s64
      %p66 = scmp.eq.s32.totalorder %s26, 0
      %p67 = por %p65, %p66
      %s68 = ssub.s32 %s27, %s39
      %s69 = ssub.s32 %s28, %s35
      %s70 = sor.u32 %s68, %s69
      %p71 = scmp.eq.s32.totalorder %s70, 0
      %s73 = sadd.s32 %s72, 1
      %s74 = scalar_select %p71, %s72, %s73
      %p77 = pneg %p71
      %p78 = scmp.eq.s32.totalorder %s20, 1
      %p79 = por %p77, %p78
      %p80 = scmp.ne.s32.totalorder %s72, %s75
      %p81 = scmp.eq.s32.totalorder %s20, 0
      %p82 = por %p80, %p81
      %p83 = scmp.ne.s32.totalorder %s72, %s75
      %p84 = scmp.eq.s32.totalorder %s25, 1
      %p85 = por %p83, %p84
      %p86 = scmp.ne.s32.totalorder %s75, %s76
      %p87 = scmp.eq.s32.totalorder %s25, 0
      %p88 = por %p86, %p87
      %p89 = scmp.ne.s32.totalorder %s75, %s76
      %p90 = scmp.eq.s32.totalorder %s26, 1
      %p91 = por %p89, %p90
      %p93 = scmp.ne.s32.totalorder %s76, %s92
      %p94 = scmp.eq.s32.totalorder %s26, 0
      %p95 = por %p93, %p94
      %s97 = sadd.s32 %s96, 1
      %p100 = scmp.eq.s32.totalorder %s20, 1
      %p101 = scmp.ne.s32.totalorder %s96, %s98
      %p102 = scmp.eq.s32.totalorder %s20, 0
      %p103 = por %p101, %p102
      %p104 = scmp.ne.s32.totalorder %s96, %s98
      %p105 = scmp.eq.s32.totalorder %s25, 1
      %p106 = por %p104, %p105
      %p107 = scmp.ne.s32.totalorder %s98, %s99
      %p108 = scmp.eq.s32.totalorder %s25, 0
      %p109 = por %p107, %p108
      %p110 = scmp.ne.s32.totalorder %s98, %s99
      %p111 = scmp.eq.s32.totalorder %s26, 1
      %p112 = por %p110, %p111
      %p114 = scmp.ne.s32.totalorder %s99, %s113
      %p115 = scmp.eq.s32.totalorder %s26, 0
      %p116 = por %p114, %p115
      %s118 = sadd.s32 %s117, 1
      %p121 = scmp.eq.s32.totalorder %s20, 1
      %p122 = scmp.ne.s32.totalorder %s117, %s119
      %p123 = scmp.eq.s32.totalorder %s20, 0
      %p124 = por %p122, %p123
      %p125 = scmp.ne.s32.totalorder %s117, %s119
      %p126 = scmp.eq.s32.totalorder %s25, 1
      %p127 = por %p125, %p126
      %p128 = scmp.ne.s32.totalorder %s119, %s120
      %p129 = scmp.eq.s32.totalorder %s25, 0
      %p130 = por %p128, %p129
      %p131 = scmp.ne.s32.totalorder %s119, %s120
      %p132 = scmp.eq.s32.totalorder %s26, 1
      %p133 = por %p131, %p132
      %p135 = scmp.ne.s32.totalorder %s120, %s134
      %p136 = scmp.eq.s32.totalorder %s26, 0
      %p137 = por %p135, %p136
      %s138 = ssub.s32 %s27, %s39
      %s139 = ssub.s32 %s28, %s35
      %s140 = sor.u32 %s138, %s139
      %p141 = scmp.eq.s32.totalorder %s140, 0
      %s143 = sadd.s32 %s142, 1
      %s144 = scalar_select %p141, %s142, %s143
      %p147 = pneg %p141
      %p148 = scmp.eq.s32.totalorder %s20, 1
      %p149 = por %p147, %p148
      %p150 = scmp.ne.s32.totalorder %s142, %s145
      %p151 = scmp.eq.s32.totalorder %s20, 0
      %p152 = por %p150, %p151
      %p153 = scmp.ne.s32.totalorder %s142, %s145
      %p154 = scmp.eq.s32.totalorder %s25, 1
      %p155 = por %p153, %p154
      %p156 = scmp.ne.s32.totalorder %s145, %s146
      %p157 = scmp.eq.s32.totalorder %s25, 0
      %p158 = por %p156, %p157
      %p159 = scmp.ne.s32.totalorder %s145, %s146
      %p160 = scmp.eq.s32.totalorder %s26, 1
      %p161 = por %p159, %p160
      %p163 = scmp.ne.s32.totalorder %s146, %s162
      %p164 = scmp.eq.s32.totalorder %s26, 0
      %p165 = por %p163, %p164
      %p166 = scmp.le.s32.totalorder 1, %s20
      %p167 = scmp.lt.s32.totalorder %s20, 3
      %p168 = pnand %p166, %p167
      %p169 = pneg %p168
      // Predicated region
      $region9: #{tpu_custom_call.1} parent=5 // pred_check
        _
      $region10: #{tpu_custom_call.1} parent=5 // pred_check_branch
        %171 = sbr.rel (%p168) target = $region12
      $region11: #{tpu_custom_call.1} parent=5 // pred_region
        %s172 = ssub.s32 %s20, 1
        // Predicated region
        $region13: #{tpu_custom_call.1} parent=11 // pred_check
          %p173 = pneg %p109
        $region14: #{tpu_custom_call.1} parent=11 // pred_check_branch
          %175 = sbr.rel (%p173) target = $region16
        $region15: #{tpu_custom_call.1} parent=11 // pred_region
          %177 = vsyncadd [#allocation6], 0
          %s179 = sshll.u32 %s2, 4
          %s180 = int_to_ptr.hbm [resolvable:$true] %s179
          %s181 = sshll.u32 [#allocation7], 4
          %s182 = int_to_ptr.vmem [resolvable:$true] %s181
          %184 = dma.hbm_to_vmem [thread:$0]  %s180, 128, %s182, [#allocation6]
        $region16: #{tpu_custom_call.1} parent=11 // pred_fallthru
          _
        // Predicated region
        $region17: #{tpu_custom_call.1} parent=11 // pred_check
          %p185 = pneg %p130
        $region18: #{tpu_custom_call.1} parent=11 // pred_check_branch
          %187 = sbr.rel (%p185) target = $region20
        $region19: #{tpu_custom_call.1} parent=11 // pred_region
          %189 = vsyncadd [#allocation9], 0
          %s191 = sshll.u32 %s3, 4
          %s192 = int_to_ptr.hbm [resolvable:$true] %s191
          %s193 = sshll.u32 [#allocation8], 4
          %s194 = int_to_ptr.vmem [resolvable:$true] %s193
          %196 = dma.hbm_to_vmem [thread:$0]  %s192, 128, %s194, [#allocation9]
        $region20: #{tpu_custom_call.1} parent=11 // pred_fallthru
          _
      $region12: #{tpu_custom_call.1} parent=5 // pred_fallthru
        _
      %p197 = scmp.lt.s32.totalorder %s20, 2
      // Predicated region
      $region21: #{tpu_custom_call.1} parent=5 // pred_check
        %p198 = pneg %p197
      $region22: #{tpu_custom_call.1} parent=5 // pred_check_branch
        %200 = sbr.rel (%p198) target = $region24
      $region23: #{tpu_custom_call.1} parent=5 // pred_region
        // Predicated region
        $region25: #{tpu_custom_call.1} parent=23 // pred_check
          %p201 = pneg %p54
        $region26: #{tpu_custom_call.1} parent=23 // pred_check_branch
          %203 = sbr.rel (%p201) target = $region28
        $region27: #{tpu_custom_call.1} parent=23 // pred_region
          %s204 = sand.u32 %s44, 1
          %s205 = scalar_lea.sflag [#allocation3], %s204
          %s206 = sand.u32 %s44, 1
          %s207 = smul.addr %s206, 8
          %s208 = scalar_lea.vmem [#allocation2], %s207
          %210 = vsyncadd %s205, 0
          %s211 = sadd.s32 %s28, %s27
          %s212 = smul.addr %s211, 8
          %s213 = scalar_lea.hbm %s0, %s212
          %s215 = sshll.u32 %s213, 4
          %s216 = int_to_ptr.hbm [resolvable:$true] %s215
          %s217 = sshll.u32 %s208, 4
          %s218 = int_to_ptr.vmem [resolvable:$true] %s217
          %220 = dma.hbm_to_vmem [thread:$0]  %s216, 128, %s218, %s205
        $region28: #{tpu_custom_call.1} parent=23 // pred_fallthru
          _
        // Predicated region
        $region29: #{tpu_custom_call.1} parent=23 // pred_check
          %p221 = pneg %p82
        $region30: #{tpu_custom_call.1} parent=23 // pred_check_branch
          %223 = sbr.rel (%p221) target = $region32
        $region31: #{tpu_custom_call.1} parent=23 // pred_region
          %s224 = sand.u32 %s20, 1
          %s225 = scalar_lea.sflag [#allocation6], %s224
          %s226 = sand.u32 %s72, 1
          %s227 = smul.addr %s226, 8
          %s228 = scalar_lea.vmem [#allocation5], %s227
          %230 = vsyncadd %s225, 0
          %s231 = sadd.s32 %s28, %s27
          %s232 = smul.addr %s231, 8
          %s233 = scalar_lea.hbm %s1, %s232
          %s235 = sshll.u32 %s233, 4
          %s236 = int_to_ptr.hbm [resolvable:$true] %s235
          %s237 = sshll.u32 %s228, 4
          %s238 = int_to_ptr.vmem [resolvable:$true] %s237
          %240 = dma.hbm_to_vmem [thread:$0]  %s236, 128, %s238, %s225
        $region32: #{tpu_custom_call.1} parent=23 // pred_fallthru
          _
      $region24: #{tpu_custom_call.1} parent=5 // pred_fallthru
        _
      %p241 = scmp.le.s32.totalorder 1, %s20
      %p242 = scmp.lt.s32.totalorder %s20, 3
      %p243 = pnand %p241, %p242
      %p244 = pneg %p243
      // Predicated region
      $region33: #{tpu_custom_call.1} parent=5 // pred_check
        _
      $region34: #{tpu_custom_call.1} parent=5 // pred_check_branch
        %246 = sbr.rel (%p243) target = $region36
      $region35: #{tpu_custom_call.1} parent=5 // pred_region
        %s247 = ssub.s32 %s20, 1
        %s248 = sand.u32 %s47, 1
        %s249 = scalar_lea.sflag [#allocation3], %s248
        %s250 = sand.u32 %s47, 1
        %s251 = smul.addr %s250, 8
        %s252 = scalar_lea.vmem [#allocation2], %s251
        // Predicated region
        $region37: #{tpu_custom_call.1} parent=35 // pred_check
          %p253 = pneg %p60
        $region38: #{tpu_custom_call.1} parent=35 // pred_check_branch
          %255 = sbr.rel (%p253) target = $region40
        $region39: #{tpu_custom_call.1} parent=35 // pred_region
          %257 = dma.done %s249, 128
        $region40: #{tpu_custom_call.1} parent=35 // pred_fallthru
          _
        %s258 = sand.u32 %s25, 1
        %s259 = scalar_lea.sflag [#allocation6], %s258
        %s260 = sand.u32 %s75, 1
        %s261 = smul.addr %s260, 8
        %s262 = scalar_lea.vmem [#allocation5], %s261
        // Predicated region
        $region41: #{tpu_custom_call.1} parent=35 // pred_check
          %p263 = pneg %p88
        $region42: #{tpu_custom_call.1} parent=35 // pred_check_branch
          %265 = sbr.rel (%p263) target = $region44
        $region43: #{tpu_custom_call.1} parent=35 // pred_region
          %267 = dma.done %s259, 128
        $region44: #{tpu_custom_call.1} parent=35 // pred_fallthru
          _
        // Predicated region
        $region45: #{tpu_custom_call.1} parent=35 // pred_check
          %p268 = pneg %p109
        $region46: #{tpu_custom_call.1} parent=35 // pred_check_branch
          %270 = sbr.rel (%p268) target = $region48
        $region47: #{tpu_custom_call.1} parent=35 // pred_region
          %272 = dma.done [#allocation6], 128
        $region48: #{tpu_custom_call.1} parent=35 // pred_fallthru
          _
        // Predicated region
        $region49: #{tpu_custom_call.1} parent=35 // pred_check
          %p273 = pneg %p130
        $region50: #{tpu_custom_call.1} parent=35 // pred_check_branch
          %275 = sbr.rel (%p273) target = $region52
        $region51: #{tpu_custom_call.1} parent=35 // pred_region
          %277 = dma.done [#allocation9], 128
        $region52: #{tpu_custom_call.1} parent=35 // pred_fallthru
          _
        %s278 = sand.u32 %s47, 1
        %s279 = scalar_lea.sflag [#allocation3], %s278
        %s280 = sand.u32 %s47, 1
        %s281 = smul.addr %s280, 8
        %s282 = scalar_lea.vmem [#allocation2], %s281
        %p283 = pneg %p60
        %p284 = pneg %p57
        %s285 = sand.u32 %s25, 1
        %s286 = scalar_lea.sflag [#allocation6], %s285
        %s287 = sand.u32 %s75, 1
        %s288 = smul.addr %s287, 8
        %s289 = scalar_lea.vmem [#allocation5], %s288
        %p290 = pneg %p88
        %p291 = pneg %p85
        %p292 = pneg %p109
        %p293 = pneg %p106
        %p294 = pneg %p130
        %p295 = pneg %p127
        %p296 = pneg %p158
        %p297 = pneg %p155
        %s298 = sand.u32 %s145, 1
        %s299 = scalar_lea.sflag [#allocation4], %s298
        %s300 = sand.u32 %s145, 1
        %s301 = smul.addr %s300, 2
        %s302 = scalar_lea.vmem [#allocation10], %s301
        %v303 = vld [vmem:[%s252] sm:$0xff]
        %v304 = vmax.f32 %v303, 0.0
        %v305 = vld [vmem:[%s262] sm:$0xff]
        %v306 = vmax.f32 %v305, 0.0
        %v307 = vld [vmem:[#allocation7] sm:$0xff]
        %vm308 = vcmask 64512
        %v310 = vsel %vm308, %v307, 0
        %312 = vmatpush.msra.mxu0 0.0
        %313 = vmatpush.msra.mxu0 0.0
        %314 = vmatpush.msra.mxu0 0.0
        %315 = vmatpush.msra.mxu0 0.0
        %316 = vmatpush.msra.mxu0 0.0
        %317 = vmatpush.msra.mxu0 0.0
        %318 = vmatpush.msra.mxu0 0.0
        %319 = vmatpush.msra.mxu0 0.0
        %320 = vmatpush.msra.mxu0 0.0
        %321 = vmatpush.msra.mxu0 0.0
        %322 = vmatpush.msra.mxu0 0.0
        %323 = vmatpush.msra.mxu0 0.0
        %324 = vmatpush.msra.mxu0 0.0
        %325 = vmatpush.msra.mxu0 0.0
        %326 = vmatpush.msra.mxu0 0.0
        %327 = vmatpush.msra.mxu0 %v304
        %328 = vmatmul.f32.gmra.mxu0 %v310
        %v329 = vpop.f32.mrf.mxu0
        %v330 = vadd.f32 0.0, %v329
        %331 = vdwg.mxu0
        %v332 = vld [vmem:[#allocation8] sm:$0xff]
        %v334 = vsel %vm308, %v332, 0
        %336 = vmatpush.msra.mxu0 0.0
        %337 = vmatpush.msra.mxu0 0.0
        %338 = vmatpush.msra.mxu0 0.0
        %339 = vmatpush.msra.mxu0 0.0
        %340 = vmatpush.msra.mxu0 0.0
        %341 = vmatpush.msra.mxu0 0.0
        %342 = vmatpush.msra.mxu0 0.0
        %343 = vmatpush.msra.mxu0 0.0
        %344 = vmatpush.msra.mxu0 0.0
        %345 = vmatpush.msra.mxu0 0.0
        %346 = vmatpush.msra.mxu0 0.0
        %347 = vmatpush.msra.mxu0 0.0
        %348 = vmatpush.msra.mxu0 0.0
        %349 = vmatpush.msra.mxu0 0.0
        %350 = vmatpush.msra.mxu0 0.0
        %351 = vmatpush.msra.mxu0 %v306
        %352 = vmatmul.f32.gmra.mxu0 %v334
        %v353 = vpop.f32.mrf.mxu0
        %v354 = vadd.f32 0.0, %v353
        %355 = vdwg.mxu0
        %vm356 = vcmask 130048
        %v357 = vsel %vm356, %v330, 0.0
        %358 = vadd.xlane.f32.xlu0 %v357
        %v359 = vpop.xlane.xlu0 %358
        %v360 = vmul.f32 %v330, %v330
        %v361 = vsel %vm356, %v360, 0.0
        %362 = vadd.xlane.f32.xlu0 %v361
        %v363 = vpop.xlane.xlu0 %362
        %v365 = vlaneseq
        %v366 = vand.u32 %v365, 127
        %v367 = vperm.slane %v359, %v366
        %v370 = vperm.slane %v363, %v366
        %vm372 = vcmask 1040384
        %v373 = vsel %vm372, %v367, %v370
        %vm374 = vcmask 58368
        %375 = vst.msk [vmem:[%s302] sm:$0x3] %vm374, %v373
        %v376 = vsel %vm356, %v354, 0.0
        %377 = vadd.xlane.f32.xlu0 %v376
        %v378 = vpop.xlane.xlu0 %377
        %v379 = vmul.f32 %v354, %v354
        %v380 = vsel %vm356, %v379, 0.0
        %381 = vadd.xlane.f32.xlu0 %v380
        %v382 = vpop.xlane.xlu0 %381
        %v384 = vperm.slane %v378, %v366
        %v387 = vperm.slane %v382, %v366
        %v389 = vsel %vm372, %v384, %v387
        %391 = vrot.lane.b32.xlu0 %v389, 8
        %v392 = vpop.permute.xlu0 %391
        %vm394 = vcmask 123968
        %395 = vst.msk [vmem:[%s302] sm:$0x3] %vm394, %v392
        %s396 = sand.u32 %s145, 1
        %s397 = scalar_lea.sflag [#allocation4], %s396
        %s398 = sand.u32 %s145, 1
        %s399 = smul.addr %s398, 2
        %s400 = scalar_lea.vmem [#allocation10], %s399
        // Predicated region
        $region53: #{tpu_custom_call.1} parent=35 // pred_check
          %p401 = pneg %p155
        $region54: #{tpu_custom_call.1} parent=35 // pred_check_branch
          %403 = sbr.rel (%p401) target = $region56
        $region55: #{tpu_custom_call.1} parent=35 // pred_region
          %405 = vsyncadd %s397, 0
          %s406 = sadd.s32 %s30, %s29
          %s407 = smul.addr %s406, 2
          %s408 = scalar_lea.hbm %s4, %s407
          %s410 = sshll.u32 %s400, 4
          %s411 = int_to_ptr.vmem [resolvable:$true] %s410
          %s412 = sshll.u32 %s408, 4
          %s413 = int_to_ptr.hbm [resolvable:$true] %s412
          %415 = dma.vmem_to_hbm [thread:$0]  %s411, 32, %s413, %s397
        $region56: #{tpu_custom_call.1} parent=35 // pred_fallthru
          _
      $region36: #{tpu_custom_call.1} parent=5 // pred_fallthru
        _
      %p416 = scmp.le.s32.totalorder 2, %s20
      // Predicated region
      $region57: #{tpu_custom_call.1} parent=5 // pred_check
        %p417 = pneg %p416
      $region58: #{tpu_custom_call.1} parent=5 // pred_check_branch
        %419 = sbr.rel (%p417) target = $region60
      $region59: #{tpu_custom_call.1} parent=5 // pred_region
        %s420 = ssub.s32 %s20, 2
        // Predicated region
        $region61: #{tpu_custom_call.1} parent=59 // pred_check
          %p421 = pneg %p161
        $region62: #{tpu_custom_call.1} parent=59 // pred_check_branch
          %423 = sbr.rel (%p421) target = $region64
        $region63: #{tpu_custom_call.1} parent=59 // pred_region
          %s424 = sand.u32 %s146, 1
          %s425 = scalar_lea.sflag [#allocation4], %s424
          %s426 = sand.u32 %s146, 1
          %s427 = smul.addr %s426, 2
          %s428 = scalar_lea.vmem [#allocation10], %s427
          %430 = dma.done %s425, 32
        $region64: #{tpu_custom_call.1} parent=59 // pred_fallthru
          _
      $region60: #{tpu_custom_call.1} parent=5 // pred_fallthru
        _
    $region6: #{tpu_custom_call.1} parent=1 // loop_footer
      %s24 = sadd.s32 1, %s20
    $region7: #{tpu_custom_call.1} parent=1 // loop_footer_branch
      %19 = sbr.rel target = $region3
    $region8: #{tpu_custom_call.1} parent=1 // loop_exit
      _
    %431 = vsyncpa [#allocation3], 1
    %s432 = scalar_lea.sflag [#allocation3], 1
    %433 = vsyncpa %s432, 1
    %434 = vsyncpa [#allocation6], 1
    %s435 = scalar_lea.sflag [#allocation6], 1
    %436 = vsyncpa %s435, 1
    %437 = vsyncpa [#allocation9], 1
    %438 = vsyncpa [#allocation4], 1
    %s439 = scalar_lea.sflag [#allocation4], 1
    %440 = vsyncpa %s439, 1

</llo_original>
